<compile_context>
chip_gen: v7x
topology: tpu7x:2x2x1
jax: 0.10.0
libtpu: 0.0.40
codegen_flags: <defaults>
</compile_context>

<pallas_src>
import jax
import jax.numpy as jnp
from jax import lax
from jax.experimental import pallas as pl
from jax.experimental.pallas import tpu as pltpu


def facebio_kernel(x_ref, w_ref, sim_ref, acc_ref):
    """K-tiled fused embedding + cosine-similarity kernel.

    x_ref   : [2B, tk] bf16  stacked [source; target] flattened-image K-tile (VMEM)
    w_ref   : [tk, D]  bf16  synthetic embedding projection K-tile          (VMEM)
    sim_ref : [B, 1]   f32   cosine similarity per pair                     (VMEM, resident)
    acc_ref : [2B, D]  f32   embedding accumulator scratch (persists over K grid)
    """
    k = pl.program_id(0)

    @pl.when(k == 0)
    def _init():
        acc_ref[...] = jnp.zeros_like(acc_ref)

    # One fused MXU matmul for BOTH images per K step (W pushed through the MXU once,
    # 2B rows per systolic pass instead of B), f32 accumulation.
    acc_ref[...] += jnp.dot(x_ref[...], w_ref[...], preferred_element_type=jnp.float32)

    @pl.when(k == pl.num_programs(0) - 1)
    def _epilogue():
        b = sim_ref.shape[0]
        emb = acc_ref[...]          # (2B, D) f32
        emb_s = emb[:b, :]          # static slices: source rows
        emb_t = emb[b:, :]          # target rows

        dot = jnp.sum(emb_s * emb_t, axis=-1, keepdims=True)
        ss = jnp.sum(emb_s * emb_s, axis=-1, keepdims=True)
        tt = jnp.sum(emb_t * emb_t, axis=-1, keepdims=True)

        # nn.CosineSimilarity(dim=1, eps=1e-8) clamps EACH norm separately:
        #   max(||s||, eps) = sqrt(max(ss, eps^2))  -> clamp ss/tt by eps^2 before rsqrt.
        # rsqrt executes on the EUP slot (free relative to the VPU/MXU path here).
        eps_sq = jnp.float32(1e-16)
        denom_sq = jnp.maximum(ss, eps_sq) * jnp.maximum(tt, eps_sq)
        # NOTE: for large batched inference, emit this output lane-dense (shape (1, B) or
        # B padded to a multiple of 128) to avoid masked vst stores; negligible at B=2.
        sim_ref[...] = dot * lax.rsqrt(denom_sq)


def facebio_forward(source_nchw, target_nchw, w_embed, *, tk=256):
    """source/target: [B, C, H, W], w_embed: [C*H*W, D] -> cosine sims [B] (f32)."""
    B = source_nchw.shape[0]
    K = source_nchw.shape[1] * source_nchw.shape[2] * source_nchw.shape[3]
    D = w_embed.shape[1]
    assert K % tk == 0 and tk % 128 == 0, "K tile must be a multiple of 128 dividing K"
    assert D % 128 == 0, "embedding dim must be lane-aligned"

    # Stack source on top of target -> one [2B, K] LHS; bf16 on the MXU,
    # f32 accumulation inside the kernel preserves cosine-similarity accuracy.
    x = jnp.concatenate(
        [source_nchw.reshape(B, K), target_nchw.reshape(B, K)], axis=0
    ).astype(jnp.bfloat16)
    w = w_embed.astype(jnp.bfloat16)

    grid = (K // tk,)  # reduction axis only; add a leading "parallel" B axis for large B

    sims = pl.pallas_call(
        facebio_kernel,
        out_shape=jax.ShapeDtypeStruct((B, 1), jnp.float32),
        grid_spec=pltpu.PrefetchScalarGridSpec(
            num_scalar_prefetch=0,
            grid=grid,
            in_specs=[
                # LHS: full 2B rows resident, stream K tiles.
                pl.BlockSpec((2 * B, tk), lambda k: (0, k)),
                # W: index_map depends only on the K index, so each W tile is DMA'd
                # once per K step (and would be reused across a B axis if added).
                pl.BlockSpec((tk, D), lambda k: (k, 0)),
            ],
            # Same output block across the reduction axis -> output stays resident.
            out_specs=pl.BlockSpec((B, 1), lambda k: (0, 0)),
            scratch_shapes=[pltpu.VMEM((2 * B, D), jnp.float32)],
        ),
        compiler_params=pltpu.CompilerParams(
            # K is a reduction -> "arbitrary". With a B grid axis, prepend "parallel"
            # so v7x shards it across its two TensorCores.
            dimension_semantics=("arbitrary",),
            # Budgeted for v7x's 64 MiB VMEM; raise toward ~100 MiB on v5e/v6e when
            # scaling tk up for realistic FaceNet K (=76800).
            vmem_limit_bytes=48 << 20,
        ),
    )(x, w)
    return sims[:, 0]


def facebio_reference(source_nchw, target_nchw, w_embed):
    """Pure-JAX reference with the same bf16-quantized operands, f32 math."""
    B = source_nchw.shape[0]
    xs = source_nchw.reshape(B, -1).astype(jnp.bfloat16).astype(jnp.float32)
    xt = target_nchw.reshape(B, -1).astype(jnp.bfloat16).astype(jnp.float32)
    w = w_embed.astype(jnp.bfloat16).astype(jnp.float32)
    es = jnp.dot(xs, w, precision=lax.Precision.HIGHEST)
    et = jnp.dot(xt, w, precision=lax.Precision.HIGHEST)
    eps = 1e-8
    dot = jnp.sum(es * et, axis=-1)
    ns = jnp.maximum(jnp.linalg.norm(es, axis=-1), eps)
    nt = jnp.maximum(jnp.linalg.norm(et, axis=-1), eps)
    return dot / (ns * nt)


if __name__ == "__main__":
    # Small shapes consistent with the module: a batch of (source, target) image pairs, NCHW.
    B, C, H, W = 2, 3, 16, 16
    D = 128  # synthetic embedding dim (stand-in for the 512-d facenet embedding)
    K = C * H * W  # 768

    key = jax.random.PRNGKey(0)
    k_src, k_tgt, k_w = jax.random.split(key, 3)
    source = jax.random.normal(k_src, (B, C, H, W), dtype=jnp.float32)
    target = jax.random.normal(k_tgt, (B, C, H, W), dtype=jnp.float32)
    # Deterministic synthetic "InceptionResnetV1" projection weights.
    w_embed = jax.random.normal(k_w, (K, D), dtype=jnp.float32) * 0.02

    sims = facebio_forward(source, target, w_embed, tk=256)
    sims = jax.block_until_ready(sims)

    ref = facebio_reference(source, target, w_embed)
    assert sims.shape == (B,)
    assert jnp.allclose(sims, ref, atol=1e-4, rtol=1e-4), (sims, ref)

    print("KERNEL_OK")
</pallas_src>

<mosaic_0001>
module attributes {stable_mosaic.version = 11 : i64} {
  func.func @facebio_kernel(%arg0: i32, %arg1: memref<4x256xbf16, #tpu.memory_space<vmem>>, %arg2: memref<256x128xbf16, #tpu.memory_space<vmem>>, %arg3: memref<2x1xf32, #tpu.memory_space<vmem>>, %arg4: memref<4x128xf32, #tpu.memory_space<vmem>>) attributes {dimension_semantics = [#tpu.dimension_semantics<arbitrary>], iteration_bounds = array<i64: 3>, scalar_prefetch = 0 : i64, scratch_operands = 1 : i64, tpu.core_type = #tpu.core_type<tc>, window_params = [{transform_indices = @transform_0, window_bounds = array<i64: 4, 256>}, {transform_indices = @transform_1, window_bounds = array<i64: 256, 128>}, {pipeline_mode = #tpu.pipeline_mode<synchronous>, transform_indices = @transform_2, window_bounds = array<i64: 2, 1>}]} {
    %c0_i32 = arith.constant 0 : i32
    %0 = arith.cmpi eq, %arg0, %c0_i32 : i32
    %1 = arith.extui %0 : i1 to i32
    %c0_i32_0 = arith.constant 0 : i32
    %2 = arith.cmpi ne, %1, %c0_i32_0 : i32
    scf.if %2 {
      %cst_9 = arith.constant 0.000000e+00 : f32
      %12 = vector.broadcast %cst_9 : f32 to vector<4x128xf32>
      %c0_10 = arith.constant 0 : index
      %c0_11 = arith.constant 0 : index
      %13 = vector.load %arg4[%c0_10, %c0_11] : memref<4x128xf32, #tpu.memory_space<vmem>>, vector<4x128xf32>
      tpu.vector_store %arg4[%c0_10, %c0_11], %12 {strides = array<i32>} : memref<4x128xf32, #tpu.memory_space<vmem>>, vector<4x128xf32>,
    } else {
    }
    %c0 = arith.constant 0 : index
    %c0_1 = arith.constant 0 : index
    %3 = vector.load %arg4[%c0, %c0_1] : memref<4x128xf32, #tpu.memory_space<vmem>>, vector<4x128xf32>
    %c0_2 = arith.constant 0 : index
    %c0_3 = arith.constant 0 : index
    %4 = vector.load %arg1[%c0_2, %c0_3] : memref<4x256xbf16, #tpu.memory_space<vmem>>, vector<4x256xbf16>
    %c0_4 = arith.constant 0 : index
    %c0_5 = arith.constant 0 : index
    %5 = vector.load %arg2[%c0_4, %c0_5] : memref<256x128xbf16, #tpu.memory_space<vmem>>, vector<256x128xbf16>
    %cst = arith.constant dense<0.000000e+00> : vector<4x128xf32>
    %6 = tpu.matmul %4, %5, %cst {dimension_numbers = #tpu.dot_dimension_numbers<[1], [0], [0], [1], [0, 0, 1, 1], [], []>} : vector<4x256xbf16>, vector<256x128xbf16>, vector<4x128xf32> -> vector<4x128xf32>
    %7 = arith.addf %3, %6 : vector<4x128xf32>
    %c0_6 = arith.constant 0 : index
    %c0_7 = arith.constant 0 : index
    %8 = vector.load %arg4[%c0_6, %c0_7] : memref<4x128xf32, #tpu.memory_space<vmem>>, vector<4x128xf32>
    tpu.vector_store %arg4[%c0_6, %c0_7], %7 {strides = array<i32>} : memref<4x128xf32, #tpu.memory_space<vmem>>, vector<4x128xf32>,
    %c2_i32 = arith.constant 2 : i32
    %9 = arith.cmpi eq, %arg0, %c2_i32 : i32
    %10 = arith.extui %9 : i1 to i32
    %c0_i32_8 = arith.constant 0 : i32
    %11 = arith.cmpi ne, %10, %c0_i32_8 : i32
    scf.if %11 {
      %c0_9 = arith.constant 0 : index
      %c0_10 = arith.constant 0 : index
      %12 = vector.load %arg4[%c0_9, %c0_10] : memref<4x128xf32, #tpu.memory_space<vmem>>, vector<4x128xf32>
      %13 = vector.extract_strided_slice %12 {offsets = [0, 0], sizes = [2, 128], strides = [1, 1]} : vector<4x128xf32> to vector<2x128xf32>
      %14 = vector.extract_strided_slice %12 {offsets = [2, 0], sizes = [2, 128], strides = [1, 1]} : vector<4x128xf32> to vector<2x128xf32>
      %15 = arith.mulf %13, %14 : vector<2x128xf32>
      %cst_11 = arith.constant dense<0.000000e+00> : vector<2xf32>
      %16 = vector.multi_reduction <add>, %15, %cst_11 [1] : vector<2x128xf32> to vector<2xf32>
      %17 = vector.shape_cast %16 : vector<2xf32> to vector<2x1xf32>
      %18 = arith.mulf %13, %13 : vector<2x128xf32>
      %cst_12 = arith.constant dense<0.000000e+00> : vector<2xf32>
      %19 = vector.multi_reduction <add>, %18, %cst_12 [1] : vector<2x128xf32> to vector<2xf32>
      %20 = vector.shape_cast %19 : vector<2xf32> to vector<2x1xf32>
      %21 = arith.mulf %14, %14 : vector<2x128xf32>
      %cst_13 = arith.constant dense<0.000000e+00> : vector<2xf32>
      %22 = vector.multi_reduction <add>, %21, %cst_13 [1] : vector<2x128xf32> to vector<2xf32>
      %23 = vector.shape_cast %22 : vector<2xf32> to vector<2x1xf32>
      %cst_14 = arith.constant 1.000000e-16 : f32
      %24 = vector.broadcast %cst_14 : f32 to vector<2x1xf32>
      %25 = arith.maximumf %20, %24 : vector<2x1xf32>
      %cst_15 = arith.constant 1.000000e-16 : f32
      %26 = vector.broadcast %cst_15 : f32 to vector<2x1xf32>
      %27 = arith.maximumf %23, %26 : vector<2x1xf32>
      %28 = arith.mulf %25, %27 : vector<2x1xf32>
      %29 = math.rsqrt %28 : vector<2x1xf32>
      %30 = arith.mulf %17, %29 : vector<2x1xf32>
      %c0_16 = arith.constant 0 : index
      %c0_17 = arith.constant 0 : index
      %31 = vector.load %arg3[%c0_16, %c0_17] : memref<2x1xf32, #tpu.memory_space<vmem>>, vector<2x1xf32>
      tpu.vector_store %arg3[%c0_16, %c0_17], %30 {strides = array<i32>} : memref<2x1xf32, #tpu.memory_space<vmem>>, vector<2x1xf32>,
    } else {
    }
    return
  }
  func.func @transform_0(%arg0: i32) -> (i32, i32) {
    %c0_i32 = arith.constant 0 : i32
    %c0_i32_0 = arith.constant 0 : i32
    return %c0_i32, %arg0 : i32, i32
  }
  func.func @transform_1(%arg0: i32) -> (i32, i32) {
    %c0_i32 = arith.constant 0 : i32
    %c0_i32_0 = arith.constant 0 : i32
    return %arg0, %c0_i32 : i32, i32
  }
  func.func @transform_2(%arg0: i32) -> (i32, i32) {
    %c0_i32 = arith.constant 0 : i32
    %c0_i32_0 = arith.constant 0 : i32
    %c0_i32_1 = arith.constant 0 : i32
    return %c0_i32, %c0_i32_0 : i32, i32
  }
}

</mosaic_0001>

<llo_original>
// kernel: tpu_custom_call.1
$region0: #{tpu_custom_call.1}
  #allocation0 [shape = 'u32[]', space=smem, size = 0x4, offset = 0x4, fixed_abs, tag = 'smem constant byte address 0x4 - core index']
  #allocation1 [shape = 'u32[144,128]{1,0:T(1,128)}', space=vmem, size = 0x12000, scoped, tag = 'internal scratch']
  #allocation2 [shape = 'f32[4,128]{1,0:T(4,128)}', space=vmem, size = 0x800, scoped, tag = 'scratch operand']
  %s0 = inlined_call_operand.hbm [shape: bf16[4,768], index: 0, kind: input, shape index: {}]
  %s1 = inlined_call_operand.hbm [shape: bf16[768,128], index: 1, kind: input, shape index: {}]
  %s2 = inlined_call_operand.vmem [shape: f32[2,1], index: 2, kind: output, shape index: {}]
  %s3 = sld [smem:[#allocation0]]
  $region57: #{tpu_custom_call.1} parent=0
    _
  %s5 = ssub.s32 1, %s3
  %s6 = scalar_select 0, %s5, %s3
  $region1: #{tpu_custom_call.1} parent=0
    #allocation3 [shape = 'u8[4096]{0}', space=vmem, size = 0x1000, scoped, tag = 'input window, operand 0']
    #allocation4 [shape = 's32[2]{0}', space=sflag, size = 0x8, scoped, tag = 'scoped memory for tpu_custom_call.1']
    #allocation5 [shape = 'u8[131072]{0}', space=vmem, size = 0x20000, scoped, tag = 'input window, operand 1']
    #allocation6 [shape = 's32[2]{0}', space=sflag, size = 0x8, scoped, tag = 'scoped memory for tpu_custom_call.1']
    %7 = vsyncpa [#allocation4], 0
    %s8 = scalar_lea.sflag [#allocation4], 1
    %9 = vsyncpa %s8, 0
    %10 = vsyncpa [#allocation6], 0
    %s11 = scalar_lea.sflag [#allocation6], 1
    %12 = vsyncpa %s11, 0
    loop: start=0, step=1, limit=5
    $region2: #{tpu_custom_call.1} parent=1 // loop_pre_header
      _
    $region3: #{tpu_custom_call.1} parent=1 // loop_header
      %s14 = sphi 0, %s18
      %p15 = scmp.ge.s32.totalorder %s14, 5
      %s24 = sphi 0, %s26
      %s27 = sphi 0, %s24
      %s28 = sphi 0, %s27
      %s44 = sphi 0, %s28
      %s50 = sphi 0, %s52
      %s53 = sphi 0, %s50
      %s54 = sphi 0, %s53
      %s70 = sphi 0, %s54
      %s74 = sphi 0, %s74
      %s76 = sphi 0, %s74
      %s77 = sphi 0, %s76
      %s91 = sphi 0, %s77
    $region4: #{tpu_custom_call.1} parent=1 // loop_header_branch
      %17 = sbr.rel (%p15) target = $region8
    $region5: #{tpu_custom_call.1} parent=1 // loop_body
      %s19 = ssub.s32 %s14, 1
      %s20 = ssub.s32 %s14, 2
      %s21 = sadd.s32 %s14, 1
      %s22 = ssub.s32 %s14, %s21
      %p23 = scmp.eq.s32.totalorder %s22, 0
      %s25 = sadd.s32 %s24, 1
      %s26 = scalar_select %p23, %s24, %s25
      %p29 = pneg %p23
      %p30 = scmp.eq.s32.totalorder %s14, 2
      %p31 = por %p29, %p30
      %p32 = scmp.ne.s32.totalorder %s24, %s27
      %p33 = scmp.eq.s32.totalorder %s14, 0
      %p34 = por %p32, %p33
      %p35 = scmp.ne.s32.totalorder %s24, %s27
      %p36 = scmp.eq.s32.totalorder %s19, 2
      %p37 = por %p35, %p36
      %p38 = scmp.ne.s32.totalorder %s27, %s28
      %p39 = scmp.eq.s32.totalorder %s19, 0
      %p40 = por %p38, %p39
      %p41 = scmp.ne.s32.totalorder %s27, %s28
      %p42 = scmp.eq.s32.totalorder %s20, 2
      %p43 = por %p41, %p42
      %p45 = scmp.ne.s32.totalorder %s28, %s44
      %p46 = scmp.eq.s32.totalorder %s20, 0
      %p47 = por %p45, %p46
      %s48 = ssub.s32 %s14, %s21
      %p49 = scmp.eq.s32.totalorder %s48, 0
      %s51 = sadd.s32 %s50, 1
      %s52 = scalar_select %p49, %s50, %s51
      %p55 = pneg %p49
      %p56 = scmp.eq.s32.totalorder %s14, 2
      %p57 = por %p55, %p56
      %p58 = scmp.ne.s32.totalorder %s50, %s53
      %p59 = scmp.eq.s32.totalorder %s14, 0
      %p60 = por %p58, %p59
      %p61 = scmp.ne.s32.totalorder %s50, %s53
      %p62 = scmp.eq.s32.totalorder %s19, 2
      %p63 = por %p61, %p62
      %p64 = scmp.ne.s32.totalorder %s53, %s54
      %p65 = scmp.eq.s32.totalorder %s19, 0
      %p66 = por %p64, %p65
      %p67 = scmp.ne.s32.totalorder %s53, %s54
      %p68 = scmp.eq.s32.totalorder %s20, 2
      %p69 = por %p67, %p68
      %p71 = scmp.ne.s32.totalorder %s54, %s70
      %p72 = scmp.eq.s32.totalorder %s20, 0
      %p73 = por %p71, %p72
      %s75 = sadd.s32 %s74, 1
      %p78 = scmp.eq.s32.totalorder %s14, 2
      %p79 = scmp.ne.s32.totalorder %s74, %s76
      %p80 = scmp.eq.s32.totalorder %s14, 0
      %p81 = por %p79, %p80
      %p82 = scmp.ne.s32.totalorder %s74, %s76
      %p83 = scmp.eq.s32.totalorder %s19, 2
      %p84 = por %p82, %p83
      %p85 = scmp.ne.s32.totalorder %s76, %s77
      %p86 = scmp.eq.s32.totalorder %s19, 0
      %p87 = por %p85, %p86
      %p88 = scmp.ne.s32.totalorder %s76, %s77
      %p89 = scmp.eq.s32.totalorder %s20, 2
      %p90 = por %p88, %p89
      %p92 = scmp.ne.s32.totalorder %s77, %s91
      %p93 = scmp.eq.s32.totalorder %s20, 0
      %p94 = por %p92, %p93
      %p95 = scmp.le.s32.totalorder 1, %s14
      %p96 = scmp.lt.s32.totalorder %s14, 4
      %p97 = pnand %p95, %p96
      %p98 = pneg %p97
      // Predicated region
      $region9: #{tpu_custom_call.1} parent=5 // pred_check
        _
      $region10: #{tpu_custom_call.1} parent=5 // pred_check_branch
        %100 = sbr.rel (%p97) target = $region12
      $region11: #{tpu_custom_call.1} parent=5 // pred_region
        %s101 = ssub.s32 %s14, 1
      $region12: #{tpu_custom_call.1} parent=5 // pred_fallthru
        _
      %p102 = scmp.lt.s32.totalorder %s14, 3
      // Predicated region
      $region13: #{tpu_custom_call.1} parent=5 // pred_check
        %p103 = pneg %p102
      $region14: #{tpu_custom_call.1} parent=5 // pred_check_branch
        %105 = sbr.rel (%p103) target = $region16
      $region15: #{tpu_custom_call.1} parent=5 // pred_region
        // Predicated region
        $region17: #{tpu_custom_call.1} parent=15 // pred_check
          %p106 = pneg %p34
        $region18: #{tpu_custom_call.1} parent=15 // pred_check_branch
          %108 = sbr.rel (%p106) target = $region20
        $region19: #{tpu_custom_call.1} parent=15 // pred_region
          %s109 = sand.u32 %s24, 1
          %s110 = scalar_lea.sflag [#allocation4], %s109
          %s111 = sand.u32 %s24, 1
          %s112 = smul.addr %s111, 4
          %s113 = scalar_lea.vmem [#allocation3], %s112
          %s114 = smul.u32 2, %s14
          %s116 = ssub.s32 64, 64
          %117 = vsyncadd %s110, %s116
          %s118 = smul.addr %s114, 32
          %s119 = scalar_lea.hbm %s0, %s118
          %s121 = sshll.u32 %s113, 4
          %s122 = int_to_ptr.vmem [resolvable:$true] %s121
          %124 = dma.hbm_to_vmem [thread:$0]  %s119, 64, %s122, %s110
        $region20: #{tpu_custom_call.1} parent=15 // pred_fallthru
          _
        // Predicated region
        $region21: #{tpu_custom_call.1} parent=15 // pred_check
          %p125 = pneg %p60
        $region22: #{tpu_custom_call.1} parent=15 // pred_check_branch
          %127 = sbr.rel (%p125) target = $region24
        $region23: #{tpu_custom_call.1} parent=15 // pred_region
          %s128 = sand.u32 %s50, 1
          %s129 = scalar_lea.sflag [#allocation6], %s128
          %s130 = sand.u32 %s50, 1
          %s131 = smul.addr %s130, 128
          %s132 = scalar_lea.vmem [#allocation5], %s131
          %s133 = smul.u32 32, %s14
          %s135 = ssub.s32 2048, 2048
          %136 = vsyncadd %s129, %s135
          %s137 = smul.addr %s133, 64
          %s138 = scalar_lea.hbm %s1, %s137
          %s139 = sshll.u32 %s132, 4
          %s140 = int_to_ptr.vmem [resolvable:$true] %s139
          %145 = dma.hbm_to_vmem [thread:$0]  %s138, 2048, %s140, %s129, 64, 64, 4
        $region24: #{tpu_custom_call.1} parent=15 // pred_fallthru
          _
      $region16: #{tpu_custom_call.1} parent=5 // pred_fallthru
        _
      %p146 = scmp.le.s32.totalorder 1, %s14
      %p147 = scmp.lt.s32.totalorder %s14, 4
      %p148 = pnand %p146, %p147
      %p149 = pneg %p148
      // Predicated region
      $region25: #{tpu_custom_call.1} parent=5 // pred_check
        _
      $region26: #{tpu_custom_call.1} parent=5 // pred_check_branch
        %151 = sbr.rel (%p148) target = $region28
      $region27: #{tpu_custom_call.1} parent=5 // pred_region
        %s152 = ssub.s32 %s14, 1
        %s153 = sand.u32 %s27, 1
        %s154 = scalar_lea.sflag [#allocation4], %s153
        %s155 = sand.u32 %s27, 1
        %s156 = smul.addr %s155, 4
        %s157 = scalar_lea.vmem [#allocation3], %s156
        // Predicated region
        $region29: #{tpu_custom_call.1} parent=27 // pred_check
          %p158 = pneg %p40
        $region30: #{tpu_custom_call.1} parent=27 // pred_check_branch
          %160 = sbr.rel (%p158) target = $region32
        $region31: #{tpu_custom_call.1} parent=27 // pred_region
          %161 = dma.done %s154, 64
        $region32: #{tpu_custom_call.1} parent=27 // pred_fallthru
          _
        %s162 = sand.u32 %s53, 1
        %s163 = scalar_lea.sflag [#allocation6], %s162
        %s164 = sand.u32 %s53, 1
        %s165 = smul.addr %s164, 128
        %s166 = scalar_lea.vmem [#allocation5], %s165
        // Predicated region
        $region33: #{tpu_custom_call.1} parent=27 // pred_check
          %p167 = pneg %p66
        $region34: #{tpu_custom_call.1} parent=27 // pred_check_branch
          %169 = sbr.rel (%p167) target = $region36
        $region35: #{tpu_custom_call.1} parent=27 // pred_region
          %170 = dma.done %s163, 2048
        $region36: #{tpu_custom_call.1} parent=27 // pred_fallthru
          _
        %s171 = sand.u32 %s27, 1
        %s172 = scalar_lea.sflag [#allocation4], %s171
        %s173 = sand.u32 %s27, 1
        %s174 = smul.addr %s173, 4
        %s175 = scalar_lea.vmem [#allocation3], %s174
        %p176 = pneg %p40
        %p177 = pneg %p37
        %s178 = sand.u32 %s53, 1
        %s179 = scalar_lea.sflag [#allocation6], %s178
        %s180 = sand.u32 %s53, 1
        %s181 = smul.addr %s180, 128
        %s182 = scalar_lea.vmem [#allocation5], %s181
        %p183 = pneg %p66
        %p184 = pneg %p63
        %p185 = pneg %p87
        %p186 = pneg %p84
        %s187 = smul.u32 2, %s19
        %s188 = smul.u32 32, %s19
        %p190 = scmp.eq.s32.totalorder %s19, 0
        // Predicated region
        $region37: #{tpu_custom_call.1} parent=27 // pred_check
          %p191 = pneg %p190
        $region38: #{tpu_custom_call.1} parent=27 // pred_check_branch
          %193 = sbr.rel (%p191) target = $region40
        $region39: #{tpu_custom_call.1} parent=27 // pred_region
          %194 = vst [vmem:[#allocation2] sm:$0xf] 0.0
        $region40: #{tpu_custom_call.1} parent=27 // pred_fallthru
          _
        %v195 = vld [vmem:[#allocation2] sm:$0xf]
        %v196 = vld [vmem:[%s157] sm:$0xf]
        %v197 = vld [vmem:[%s166] sm:$0xf]
        %v198 = vld [vmem:[%s166 + $0x4] sm:$0xf]
        %v199 = vld [vmem:[%s166 + $0x8] sm:$0xf]
        %v200 = vld [vmem:[%s166 + $0xc] sm:$0xf]
        %v201 = vld [vmem:[%s166 + $0x10] sm:$0xf]
        %v202 = vld [vmem:[%s166 + $0x14] sm:$0xf]
        %v203 = vld [vmem:[%s166 + $0x18] sm:$0xf]
        %v204 = vld [vmem:[%s166 + $0x1c] sm:$0xf]
        %v205 = vld [vmem:[%s166 + $0x20] sm:$0xf]
        %v206 = vld [vmem:[%s166 + $0x24] sm:$0xf]
        %v207 = vld [vmem:[%s166 + $0x28] sm:$0xf]
        %v208 = vld [vmem:[%s166 + $0x2c] sm:$0xf]
        %v209 = vld [vmem:[%s166 + $0x30] sm:$0xf]
        %v210 = vld [vmem:[%s166 + $0x34] sm:$0xf]
        %v211 = vld [vmem:[%s166 + $0x38] sm:$0xf]
        %v212 = vld [vmem:[%s166 + $0x3c] sm:$0xf]
        %v213 = vld [vmem:[%s166 + $0x40] sm:$0xf]
        %v214 = vld [vmem:[%s166 + $0x44] sm:$0xf]
        %v215 = vld [vmem:[%s166 + $0x48] sm:$0xf]
        %v216 = vld [vmem:[%s166 + $0x4c] sm:$0xf]
        %v217 = vld [vmem:[%s166 + $0x50] sm:$0xf]
        %v218 = vld [vmem:[%s166 + $0x54] sm:$0xf]
        %v219 = vld [vmem:[%s166 + $0x58] sm:$0xf]
        %v220 = vld [vmem:[%s166 + $0x5c] sm:$0xf]
        %v221 = vld [vmem:[%s166 + $0x60] sm:$0xf]
        %v222 = vld [vmem:[%s166 + $0x64] sm:$0xf]
        %v223 = vld [vmem:[%s166 + $0x68] sm:$0xf]
        %v224 = vld [vmem:[%s166 + $0x6c] sm:$0xf]
        %v225 = vld [vmem:[%s166 + $0x70] sm:$0xf]
        %v226 = vld [vmem:[%s166 + $0x74] sm:$0xf]
        %v227 = vld [vmem:[%s166 + $0x78] sm:$0xf]
        %v228 = vld [vmem:[%s166 + $0x7c] sm:$0xf]
        %v231 = vunpack.c.l.s4 1983009808
        %v232 = vunpack.c.0.s8 %v231
        %v233 = vlaneseq
        %v234 = vshrl.u32 %v233, 7
        %v235 = vsub.s32 %v232, %v234
        %v236 = vrot.slane %v196, %v235
        %v237 = vcombine.high %v236, %v236
        %v272 = vunpack.c.l.b16 %v197
        %v273 = vunpack.c.l.b16 %v198
        %v274 = vunpack.c.l.b16 %v199
        %v275 = vunpack.c.l.b16 %v200
        %v276 = vunpack.c.l.b16 %v201
        %v277 = vunpack.c.l.b16 %v202
        %v278 = vunpack.c.l.b16 %v203
        %v279 = vunpack.c.l.b16 %v204
        %v280 = vunpack.c.l.b16 %v205
        %v281 = vunpack.c.l.b16 %v206
        %v282 = vunpack.c.l.b16 %v207
        %v283 = vunpack.c.l.b16 %v208
        %v284 = vunpack.c.l.b16 %v209
        %v285 = vunpack.c.l.b16 %v210
        %v286 = vunpack.c.l.b16 %v211
        %v287 = vunpack.c.l.b16 %v212
        %v288 = vunpack.c.l.b16 %v213
        %v289 = vunpack.c.l.b16 %v214
        %v290 = vunpack.c.l.b16 %v215
        %v291 = vunpack.c.l.b16 %v216
        %v292 = vunpack.c.l.b16 %v217
        %v293 = vunpack.c.l.b16 %v218
        %v294 = vunpack.c.l.b16 %v219
        %v295 = vunpack.c.l.b16 %v220
        %v296 = vunpack.c.l.b16 %v221
        %v297 = vunpack.c.l.b16 %v222
        %v298 = vunpack.c.l.b16 %v223
        %v299 = vunpack.c.l.b16 %v224
        %v300 = vunpack.c.l.b16 %v225
        %v301 = vunpack.c.l.b16 %v226
        %v302 = vunpack.c.l.b16 %v227
        %v303 = vunpack.c.l.b16 %v228
        %v304 = vpack.c.b16 %v273, %v272
        %v305 = vpack.c.b16 %v275, %v274
        %v306 = vpack.c.b16 %v277, %v276
        %v307 = vpack.c.b16 %v279, %v278
        %v308 = vpack.c.b16 %v281, %v280
        %v309 = vpack.c.b16 %v283, %v282
        %v310 = vpack.c.b16 %v285, %v284
        %v311 = vpack.c.b16 %v287, %v286
        %v312 = vpack.c.b16 %v289, %v288
        %v313 = vpack.c.b16 %v291, %v290
        %v314 = vpack.c.b16 %v293, %v292
        %v315 = vpack.c.b16 %v295, %v294
        %v316 = vpack.c.b16 %v297, %v296
        %v317 = vpack.c.b16 %v299, %v298
        %v318 = vpack.c.b16 %v301, %v300
        %v319 = vpack.c.b16 %v303, %v302
        %336 = vmatprep.subr.bf16.mxu0 0
        %337 = vmatpush1.bf16.msra.mxu0 %v304
        %338 = vmatprep.subr.bf16.mxu0 0
        %339 = vmatpush1.bf16.msra.mxu0 %v305
        %340 = vmatprep.subr.bf16.mxu0 0
        %341 = vmatpush1.bf16.msra.mxu0 %v306
        %342 = vmatprep.subr.bf16.mxu0 0
        %343 = vmatpush1.bf16.msra.mxu0 %v307
        %344 = vmatprep.subr.bf16.mxu0 0
        %345 = vmatpush1.bf16.msra.mxu0 %v308
        %346 = vmatprep.subr.bf16.mxu0 0
        %347 = vmatpush1.bf16.msra.mxu0 %v309
        %348 = vmatprep.subr.bf16.mxu0 0
        %349 = vmatpush1.bf16.msra.mxu0 %v310
        %350 = vmatprep.subr.bf16.mxu0 0
        %351 = vmatpush1.bf16.msra.mxu0 %v311
        %352 = vmatprep.subr.bf16.mxu0 0
        %353 = vmatpush1.bf16.msra.mxu0 %v312
        %354 = vmatprep.subr.bf16.mxu0 0
        %355 = vmatpush1.bf16.msra.mxu0 %v313
        %356 = vmatprep.subr.bf16.mxu0 0
        %357 = vmatpush1.bf16.msra.mxu0 %v314
        %358 = vmatprep.subr.bf16.mxu0 0
        %359 = vmatpush1.bf16.msra.mxu0 %v315
        %360 = vmatprep.subr.bf16.mxu0 0
        %361 = vmatpush1.bf16.msra.mxu0 %v316
        %362 = vmatprep.subr.bf16.mxu0 0
        %363 = vmatpush1.bf16.msra.mxu0 %v317
        %364 = vmatprep.subr.bf16.mxu0 0
        %365 = vmatpush1.bf16.msra.mxu0 %v318
        %366 = vmatprep.subr.bf16.mxu0 0
        %367 = vmatpush1.bf16.msra.mxu0 %v319
        %368 = vmatprep.mubr.bf16.mxu0 %v237
        %369 = vmatmul.mubr.bf16.gmra.mrb[0].mxu0 %v236
        %v370 = vpop.f32.mrb[0].mxu0
        %v371 = vadd.f32 0.0, %v370
        %v372 = vpop.f32.mrb[0].mxu0
        %v373 = vpop.f32.mrb[0].mxu0
        %v374 = vpop.f32.mrb[0].mxu0
        %375 = vdwg.mxu0
        %v376 = vadd.f32 %v195, %v371
        %377 = vst [vmem:[#allocation2] sm:$0xf] %v376
        %p378 = scmp.eq.s32.totalorder %s19, 2
        // Predicated region
        $region41: #{tpu_custom_call.1} parent=27 // pred_check
          %p379 = pneg %p378
        $region42: #{tpu_custom_call.1} parent=27 // pred_check_branch
          %381 = sbr.rel (%p379) target = $region44
        $region43: #{tpu_custom_call.1} parent=27 // pred_region
          %v382 = vld [vmem:[#allocation2] sm:$0xf]
          %v384 = vrot.slane %v382, 2
          %v386 = vmul.f32 %v382, %v384
          %vm387 = vcmask 1041408
          %v388 = vsel %vm387, %v386, 0.0
          %389 = vadd.xlane.f32.xlu0 %v388
          %v390 = vpop.xlane.xlu0 %389
          %v391 = vmul.f32 %v382, %v382
          %v392 = vsel %vm387, %v391, 0.0
          %393 = vadd.xlane.f32.xlu0 %v392
          %v394 = vpop.xlane.xlu0 %393
          %vm395 = vcmask 1043458
          %v396 = vsel %vm395, %v391, 0.0
          %397 = vadd.xlane.f32.xlu0 %v396
          %v398 = vpop.xlane.xlu0 %397
          %v399 = vmax.f32 %v394, 1e-16
          %v400 = vmax.f32 %v398, 1e-16
          %v402 = vrot.slane %v400, 2
          %v404 = vmul.f32 %v399, %v402
          %v405 = vrsqrt.pop %v404
          %v406 = vmul.f32 %v390, %v405
          %vm407 = vcmask 1024
          %408 = vst.msk [vmem:[%s2] sm:$0x3] %vm407, %v406
        $region44: #{tpu_custom_call.1} parent=27 // pred_fallthru
          _
        // Predicated region
        $region45: #{tpu_custom_call.1} parent=27 // pred_check
          %p409 = pneg %p84
        $region46: #{tpu_custom_call.1} parent=27 // pred_check_branch
          %411 = sbr.rel (%p409) target = $region48
        $region47: #{tpu_custom_call.1} parent=27 // pred_region
          _
        $region48: #{tpu_custom_call.1} parent=27 // pred_fallthru
          _
        // Predicated region
        $region49: #{tpu_custom_call.1} parent=27 // pred_check
          %p412 = pneg %p84
        $region50: #{tpu_custom_call.1} parent=27 // pred_check_branch
          %414 = sbr.rel (%p412) target = $region52
        $region51: #{tpu_custom_call.1} parent=27 // pred_region
          _
        $region52: #{tpu_custom_call.1} parent=27 // pred_fallthru
          _
      $region28: #{tpu_custom_call.1} parent=5 // pred_fallthru
        _
      %p415 = scmp.le.s32.totalorder 2, %s14
      // Predicated region
      $region53: #{tpu_custom_call.1} parent=5 // pred_check
        %p416 = pneg %p415
      $region54: #{tpu_custom_call.1} parent=5 // pred_check_branch
        %418 = sbr.rel (%p416) target = $region56
      $region55: #{tpu_custom_call.1} parent=5 // pred_region
        %s419 = ssub.s32 %s14, 2
      $region56: #{tpu_custom_call.1} parent=5 // pred_fallthru
        _
    $region6: #{tpu_custom_call.1} parent=1 // loop_footer
      %s18 = sadd.s32 1, %s14
    $region7: #{tpu_custom_call.1} parent=1 // loop_footer_branch
      %13 = sbr.rel target = $region3
    $region8: #{tpu_custom_call.1} parent=1 // loop_exit
      _
    %420 = vsyncpa [#allocation4], 1
    %s421 = scalar_lea.sflag [#allocation4], 1
    %422 = vsyncpa %s421, 1
    %423 = vsyncpa [#allocation6], 1
    %s424 = scalar_lea.sflag [#allocation6], 1
    %425 = vsyncpa %s424, 1

</llo_original>
